<compile_context>
chip_gen: v6e
topology: v6e:2x2x1
jax: 0.10.0
libtpu: 0.0.40
codegen_flags: <defaults>
</compile_context>

<pallas_src>
from enum import Enum
from functools import reduce
import operator

import jax
import jax.numpy as jnp
from jax.experimental import pallas as pl
from jax.experimental.pallas import tpu as pltpu


# ----------------------------- Pallas kernels ------------------------------ #

def _linear_kernel_f32out(x_ref, w_ref, b_ref, o_ref):
    """f32-output path: accumulate directly into the resident output block."""
    # x_ref: (tm, tk) bf16/f32, w_ref: (tk, tn) bf16/f32,
    # b_ref: (1, tn) f32,  o_ref: (tm, tn) f32 (resident across the K axis).
    k = pl.program_id(2)

    @pl.when(k == 0)
    def _():
        o_ref[...] = jnp.zeros_like(o_ref)

    o_ref[...] += jnp.dot(
        x_ref[...], w_ref[...], preferred_element_type=jnp.float32
    )

    # Bias added exactly once, at the last reduction step.
    @pl.when(k == pl.num_programs(2) - 1)
    def _():
        o_ref[...] += b_ref[...]


def _linear_kernel_acc(x_ref, w_ref, b_ref, o_ref, acc_ref):
    """Narrow-output path: f32 VMEM accumulator scratch, cast in epilogue."""
    k = pl.program_id(2)

    @pl.when(k == 0)
    def _():
        acc_ref[...] = jnp.zeros_like(acc_ref)

    acc_ref[...] += jnp.dot(
        x_ref[...], w_ref[...], preferred_element_type=jnp.float32
    )

    @pl.when(k == pl.num_programs(2) - 1)
    def _():
        o_ref[...] = (acc_ref[...] + b_ref[...]).astype(o_ref.dtype)


# --------------------------- tile / budget helpers -------------------------- #

_LANE = 128
# Footprint budget chosen so double-buffered tiles fit comfortably inside the
# smallest per-TensorCore VMEM (v7x: 64 MiB physical, ~32 MiB default scoped).
_VMEM_FOOTPRINT_BUDGET = 28 * 1024 * 1024


def _round_up(x, m):
    return ((x + m - 1) // m) * m


def _largest_divisor_tile(dim, candidates):
    for c in candidates:
        if dim >= c and dim % c == 0:
            return c
    return _LANE  # dims are padded to 128 multiples, so 128 always divides


def _footprint_bytes(tm, tn, tk, in_isz, out_isz, needs_scratch, w_buffers=2):
    return (2 * tm * tk * in_isz                  # x (double-buffered)
            + w_buffers * tk * tn * in_isz        # weight
            + 2 * tn * 4                          # bias (f32)
            + 2 * tm * tn * out_isz               # output block
            + (tm * tn * 4 if needs_scratch else 0))


def _choose_tiles(m_pad, k_pad, n_pad, in_isz, out_isz, needs_scratch):
    # tm: collapse the M axis for decode-like small M so the weight streams
    # from HBM exactly once per call; otherwise largest 128-multiple divisor.
    if m_pad <= 512:
        tm = m_pad
    else:
        tm = _largest_divisor_tile(m_pad, (512, 256, 128))

    # tn: prefer 256/512 alignment (v6e/v7x MXU is 2x256x256).
    tn = _largest_divisor_tile(n_pad, (512, 256, 128))

    # v7x megacore: make sure the parallel axes expose >= 2 blocks so both
    # TensorCores get work even when the M axis is collapsed.
    while (m_pad // tm) * (n_pad // tn) < 2 and tn > _LANE:
        tn //= 2

    # tk: as large as fits -> few accumulator read-modify-write passes
    # (v5e has a single vector-store slot; MXU should be the binding unit).
    tk = _largest_divisor_tile(k_pad, (2048, 1024, 512, 256, 128))

    def fits(tm_, tn_, tk_):
        return _footprint_bytes(tm_, tn_, tk_, in_isz, out_isz,
                                needs_scratch) <= _VMEM_FOOTPRINT_BUDGET

    while tk > _LANE and not fits(tm, tn, tk):
        tk //= 2
    while tn > _LANE and not fits(tm, tn, tk):
        tn //= 2
    while tm > _LANE and not fits(tm, tn, tk):
        tm //= 2
    return tm, tn, tk


# --------------------------------- wrapper ---------------------------------- #

def pallas_linear(x2d, w_kn, b_n, *, use_bf16_mxu=True):
    """y = x2d @ w_kn + b_n with a tiled, double-buffered Pallas TPU kernel.

    x2d : (M, K)   activations (rows = batch*seq)
    w_kn: (K, N)   weight already in kernel layout (no per-call transpose)
    b_n : (N,)     bias
    Output dtype matches x2d's dtype; accumulation is always f32.
    """
    M, K = x2d.shape
    Kw, N = w_kn.shape
    assert K == Kw, (K, Kw)
    assert b_n.shape == (N,), b_n.shape
    out_dtype = x2d.dtype

    # Feed the MXU bf16 (native on v5e/v6e/v7x); f32 matmul is emulated and
    # 2-4x slower, and bf16 halves HBM/VMEM traffic per tile.
    # TODO(synk): a v7x fp8 weight path (quantize at gather time) would halve
    # weight HBM traffic again; not implemented here.
    if use_bf16_mxu and jnp.dtype(x2d.dtype).itemsize > 2:
        x2d = x2d.astype(jnp.bfloat16)
    if use_bf16_mxu and jnp.dtype(w_kn.dtype).itemsize > 2:
        w_kn = w_kn.astype(jnp.bfloat16)
    b2d = b_n.astype(jnp.float32).reshape(1, N)

    # Pad every dim up to a 128 multiple: never a tiny-sublane tile, never a
    # non-divisible full-extent fallback.  Zero padding is exact for matmul.
    m_pad = _round_up(M, _LANE)
    k_pad = _round_up(K, _LANE)
    n_pad = _round_up(N, _LANE)
    if (m_pad, k_pad) != (M, K):
        x2d = jnp.pad(x2d, ((0, m_pad - M), (0, k_pad - K)))
    if (k_pad, n_pad) != (K, N):
        w_kn = jnp.pad(w_kn, ((0, k_pad - K), (0, n_pad - N)))
    if n_pad != N:
        b2d = jnp.pad(b2d, ((0, 0), (0, n_pad - N)))

    needs_scratch = out_dtype != jnp.float32
    in_isz = jnp.dtype(x2d.dtype).itemsize
    out_isz = jnp.dtype(out_dtype).itemsize

    tm, tn, tk = _choose_tiles(m_pad, k_pad, n_pad, in_isz, out_isz,
                               needs_scratch)
    grid = (m_pad // tm, n_pad // tn, k_pad // tk)
    k_steps = grid[2]

    # Optional 3-deep weight pipelining for long-K layers (the per-step weight
    # DMA is the largest transfer); only if the extra buffer fits the budget.
    w_buffers = 2
    if (k_steps >= 4 and hasattr(pl, "Buffered")
            and _footprint_bytes(tm, tn, tk, in_isz, out_isz, needs_scratch, 3)
            <= _VMEM_FOOTPRINT_BUDGET):
        w_buffers = 3
    w_spec = pl.BlockSpec((tk, tn), lambda i, j, k: (k, j))
    if w_buffers == 3:
        try:
            w_spec = pl.BlockSpec((tk, tn), lambda i, j, k: (k, j),
                                  pipeline_mode=pl.Buffered(3))
        except TypeError:
            # TODO(synk): jax build without pipeline_mode kwarg; keep default.
            w_buffers = 2

    footprint = _footprint_bytes(tm, tn, tk, in_isz, out_isz, needs_scratch,
                                 w_buffers)
    vmem_limit = int(min(48 * 1024 * 1024,
                         max(32 * 1024 * 1024, footprint + (8 << 20))))

    if needs_scratch:
        kernel = _linear_kernel_acc
        scratch_shapes = [pltpu.VMEM((tm, tn), jnp.float32)]
    else:
        kernel = _linear_kernel_f32out
        scratch_shapes = []

    # Tiled HBM traffic: x is re-read N/tn times, the weight M/tm times.
    cost = pl.CostEstimate(
        flops=2 * m_pad * k_pad * n_pad,
        transcendentals=0,
        bytes_accessed=int(
            m_pad * k_pad * (n_pad // tn) * in_isz
            + k_pad * n_pad * (m_pad // tm) * in_isz
            + m_pad * n_pad * out_isz
            + n_pad * 4 * (m_pad // tm)
        ),
    )

    y_pad = pl.pallas_call(
        kernel,
        out_shape=jax.ShapeDtypeStruct((m_pad, n_pad), out_dtype),
        grid_spec=pltpu.PrefetchScalarGridSpec(
            num_scalar_prefetch=0,
            grid=grid,
            in_specs=[
                pl.BlockSpec((tm, tk), lambda i, j, k: (i, k)),   # x tile
                w_spec,                                           # w tile
                pl.BlockSpec((1, tn), lambda i, j, k: (0, j)),    # bias tile
            ],
            out_specs=pl.BlockSpec((tm, tn), lambda i, j, k: (i, j)),
            scratch_shapes=scratch_shapes,
        ),
        compiler_params=pltpu.CompilerParams(
            dimension_semantics=("parallel", "parallel", "arbitrary"),
            vmem_limit_bytes=vmem_limit,
        ),
        cost_estimate=cost,
    )(x2d, w_kn, b2d)

    if (m_pad, n_pad) != (M, N):
        y_pad = y_pad[:M, :N]
    return y_pad


# ------------------------- Shadow parameter machinery ---------------------- #

class ShadowModuleStatus(Enum):
    RELEASE = 0
    GATHER = 1


class ShadowParamStatus(Enum):
    NOT_AVAILABLE = 0
    INFLIGHT = 1
    AVAILABLE = 2


class ShadowParam:
    """JAX analogue of a torch Parameter converted by _convert_to_shadow_parameters."""

    def __init__(self, init_value):
        self.shadow_shape = tuple(init_value.shape)
        self.shadow_numel = reduce(operator.mul, self.shadow_shape, 1)
        self.dtype = init_value.dtype
        self._shadow_status = ShadowParamStatus.NOT_AVAILABLE
        # _convert_to_shadow_parameters: data -> empty tensor
        self.data = jnp.empty((0,), dtype=self.dtype)

    # func1 in the reference: materialize a zeros tensor of the shadow shape.
    # TODO(synk): the production path replaces this with a dist.broadcast of the
    # real weights from the src rank; there is no single-host Pallas equivalent,
    # so we reproduce the reference func1 (zeros) exactly.
    def func1(self):
        self.data = jnp.zeros(self.shadow_shape, dtype=self.dtype)

    # func2 in the reference: release storage.
    def func2(self):
        self.data = jnp.empty((0,), dtype=self.dtype)


class LinearLeaf:
    """Leaf module whose hot-path matmul runs in the Pallas kernel.

    The weight is kept (and gathered by func1) directly in (K, N) =
    (in_features, out_features) layout — the kernel-ready layout — so no
    per-forward HBM transpose is needed.  (PyTorch Linear stores (N, K); the
    layout change happens once, at construction/gather time, not per call.)
    """

    def __init__(self, key, in_features, out_features, dtype=jnp.float32):
        kw, kb = jax.random.split(key)
        bound = 1.0 / (in_features ** 0.5)
        w_kn = jax.random.uniform(
            kw, (in_features, out_features), dtype, -bound, bound
        )
        b = jax.random.uniform(kb, (out_features,), dtype, -bound, bound)
        self.in_features = in_features
        self.out_features = out_features
        self.weight = ShadowParam(w_kn)   # (K, N) kernel layout
        self.bias = ShadowParam(b)

    def parameters(self):
        return [self.weight, self.bias]

    def __call__(self, x):
        # x: (batch, seq, in_features)
        B, S, K = x.shape
        assert K == self.in_features
        N = self.out_features
        y2d = pallas_linear(x.reshape(B * S, K), self.weight.data, self.bias.data)
        return y2d.reshape(B, S, N)


class ShadowModule:
    """JAX port of puzzle ShadowModule: status machine + gather/release hooks
    wrapped around the leaf module's forward; forward is a pure pass-through."""

    def __init__(self, module):
        self.module = module
        self._status = ShadowModuleStatus.RELEASE

    def set_gather_params(self):
        assert self._status is ShadowModuleStatus.RELEASE
        self._status = ShadowModuleStatus.GATHER

    def set_release_params(self):
        assert self._status is ShadowModuleStatus.GATHER
        self._status = ShadowModuleStatus.RELEASE

    def _pre_forward_hook(self):
        if not self._status == ShadowModuleStatus.GATHER:
            return
        for param in self.module.parameters():
            if param._shadow_status == ShadowParamStatus.NOT_AVAILABLE:
                param._shadow_status = ShadowParamStatus.INFLIGHT
                param.func1()
                param._shadow_status = ShadowParamStatus.AVAILABLE

    def _post_forward_hook(self):
        if not self._status == ShadowModuleStatus.RELEASE:
            return
        for param in self.module.parameters():
            if param._shadow_status == ShadowParamStatus.AVAILABLE:
                param._shadow_status = ShadowParamStatus.INFLIGHT
                param.func2()
                param._shadow_status = ShadowParamStatus.NOT_AVAILABLE

    def forward(self, *inputs, **kwargs):
        self._pre_forward_hook()
        outputs = self.module(*inputs, **kwargs)
        self._post_forward_hook()
        return outputs

    __call__ = forward


# --------------------------------- demo ----------------------------------- #

if __name__ == "__main__":
    key = jax.random.PRNGKey(0)
    k_x, k_mod = jax.random.split(key)

    # Lane-dense small shapes: M = batch*seq = 128, K = N = 256.
    batch, seq, hidden, out_features = 2, 64, 256, 256
    x = jax.random.normal(k_x, (batch, seq, hidden), dtype=jnp.float32)

    # --- standalone numerical check of the Pallas matmul (real weights) ---
    kw, kb = jax.random.split(k_mod)
    w_real = jax.random.normal(kw, (hidden, out_features), jnp.float32) * 0.02
    b_real = jax.random.normal(kb, (out_features,), jnp.float32) * 0.02
    x2d = x.reshape(-1, hidden)
    y_pallas = jax.block_until_ready(pallas_linear(x2d, w_real, b_real))
    y_ref = jnp.dot(
        x2d.astype(jnp.bfloat16), w_real.astype(jnp.bfloat16),
        preferred_element_type=jnp.float32,
    ) + b_real
    assert y_pallas.shape == (batch * seq, out_features)
    assert y_pallas.dtype == jnp.float32
    assert bool(jnp.allclose(y_pallas, y_ref, rtol=2e-2, atol=2e-2))

    # --- ShadowModule semantics: gather (zeros per reference func1) -> run ---
    leaf = LinearLeaf(k_mod, in_features=hidden, out_features=out_features)
    shadow = ShadowModule(leaf)

    shadow.set_gather_params()
    y = shadow(x)
    y = jax.block_until_ready(y)

    assert y.shape == (batch, seq, out_features)
    assert y.dtype == jnp.float32
    # Reference semantics check: gathered params are zeros -> output is zeros.
    assert bool(jnp.all(y == 0.0))
    assert leaf.weight._shadow_status == ShadowParamStatus.AVAILABLE

    # Release phase: post-hook of the next forward drops params back to empty.
    shadow.set_release_params()
    shadow._post_forward_hook()
    assert leaf.weight.data.size == 0
    assert leaf.weight._shadow_status == ShadowParamStatus.NOT_AVAILABLE

    print("KERNEL_OK")
</pallas_src>

<mosaic_0001>
module attributes {stable_mosaic.version = 11 : i64} {
  func.func @_linear_kernel_f32out(%arg0: i32, %arg1: i32, %arg2: i32, %arg3: memref<128x256xbf16, #tpu.memory_space<vmem>>, %arg4: memref<256x128xbf16, #tpu.memory_space<vmem>>, %arg5: memref<1x128xf32, #tpu.memory_space<vmem>>, %arg6: memref<128x128xf32, #tpu.memory_space<vmem>>) attributes {dimension_semantics = [#tpu.dimension_semantics<parallel>, #tpu.dimension_semantics<parallel>, #tpu.dimension_semantics<arbitrary>], iteration_bounds = array<i64: 1, 2, 1>, scalar_prefetch = 0 : i64, scratch_operands = 0 : i64, tpu.core_type = #tpu.core_type<tc>, window_params = [{transform_indices = @transform_0, window_bounds = array<i64: 128, 256>}, {transform_indices = @transform_1, window_bounds = array<i64: 256, 128>}, {transform_indices = @transform_2, window_bounds = array<i64: 1, 128>}, {transform_indices = @transform_3, window_bounds = array<i64: 128, 128>}]} {
    %c0_i32 = arith.constant 0 : i32
    %0 = arith.cmpi eq, %arg2, %c0_i32 : i32
    %1 = arith.extui %0 : i1 to i32
    %c0_i32_0 = arith.constant 0 : i32
    %2 = arith.cmpi ne, %1, %c0_i32_0 : i32
    scf.if %2 {
      %cst_10 = arith.constant 0.000000e+00 : f32
      %12 = vector.broadcast %cst_10 : f32 to vector<128x128xf32>
      %c0_11 = arith.constant 0 : index
      %c0_12 = arith.constant 0 : index
      %13 = vector.load %arg6[%c0_11, %c0_12] : memref<128x128xf32, #tpu.memory_space<vmem>>, vector<128x128xf32>
      tpu.vector_store %arg6[%c0_11, %c0_12], %12 {strides = array<i32>} : memref<128x128xf32, #tpu.memory_space<vmem>>, vector<128x128xf32>,
    } else {
    }
    %c0 = arith.constant 0 : index
    %c0_1 = arith.constant 0 : index
    %3 = vector.load %arg6[%c0, %c0_1] : memref<128x128xf32, #tpu.memory_space<vmem>>, vector<128x128xf32>
    %c0_2 = arith.constant 0 : index
    %c0_3 = arith.constant 0 : index
    %4 = vector.load %arg3[%c0_2, %c0_3] : memref<128x256xbf16, #tpu.memory_space<vmem>>, vector<128x256xbf16>
    %c0_4 = arith.constant 0 : index
    %c0_5 = arith.constant 0 : index
    %5 = vector.load %arg4[%c0_4, %c0_5] : memref<256x128xbf16, #tpu.memory_space<vmem>>, vector<256x128xbf16>
    %cst = arith.constant dense<0.000000e+00> : vector<128x128xf32>
    %6 = tpu.matmul %4, %5, %cst {dimension_numbers = #tpu.dot_dimension_numbers<[1], [0], [0], [1], [0, 0, 1, 1], [], []>} : vector<128x256xbf16>, vector<256x128xbf16>, vector<128x128xf32> -> vector<128x128xf32>
    %7 = arith.addf %3, %6 : vector<128x128xf32>
    %c0_6 = arith.constant 0 : index
    %c0_7 = arith.constant 0 : index
    %8 = vector.load %arg6[%c0_6, %c0_7] : memref<128x128xf32, #tpu.memory_space<vmem>>, vector<128x128xf32>
    tpu.vector_store %arg6[%c0_6, %c0_7], %7 {strides = array<i32>} : memref<128x128xf32, #tpu.memory_space<vmem>>, vector<128x128xf32>,
    %c0_i32_8 = arith.constant 0 : i32
    %9 = arith.cmpi eq, %arg2, %c0_i32_8 : i32
    %10 = arith.extui %9 : i1 to i32
    %c0_i32_9 = arith.constant 0 : i32
    %11 = arith.cmpi ne, %10, %c0_i32_9 : i32
    scf.if %11 {
      %c0_10 = arith.constant 0 : index
      %c0_11 = arith.constant 0 : index
      %12 = vector.load %arg6[%c0_10, %c0_11] : memref<128x128xf32, #tpu.memory_space<vmem>>, vector<128x128xf32>
      %c0_12 = arith.constant 0 : index
      %c0_13 = arith.constant 0 : index
      %13 = vector.load %arg5[%c0_12, %c0_13] : memref<1x128xf32, #tpu.memory_space<vmem>>, vector<1x128xf32>
      %14 = vector.broadcast %13 : vector<1x128xf32> to vector<128x128xf32>
      %15 = arith.addf %12, %14 : vector<128x128xf32>
      %c0_14 = arith.constant 0 : index
      %c0_15 = arith.constant 0 : index
      %16 = vector.load %arg6[%c0_14, %c0_15] : memref<128x128xf32, #tpu.memory_space<vmem>>, vector<128x128xf32>
      tpu.vector_store %arg6[%c0_14, %c0_15], %15 {strides = array<i32>} : memref<128x128xf32, #tpu.memory_space<vmem>>, vector<128x128xf32>,
    } else {
    }
    return
  }
  func.func @transform_0(%arg0: i32, %arg1: i32, %arg2: i32) -> (i32, i32) {
    %c0_i32 = arith.constant 0 : i32
    return %arg0, %arg2 : i32, i32
  }
  func.func @transform_1(%arg0: i32, %arg1: i32, %arg2: i32) -> (i32, i32) {
    %c0_i32 = arith.constant 0 : i32
    return %arg2, %arg1 : i32, i32
  }
  func.func @transform_2(%arg0: i32, %arg1: i32, %arg2: i32) -> (i32, i32) {
    %c0_i32 = arith.constant 0 : i32
    %c0_i32_0 = arith.constant 0 : i32
    return %c0_i32, %arg1 : i32, i32
  }
  func.func @transform_3(%arg0: i32, %arg1: i32, %arg2: i32) -> (i32, i32) {
    %c0_i32 = arith.constant 0 : i32
    return %arg0, %arg1 : i32, i32
  }
}

</mosaic_0001>

<llo_original>
// kernel: tpu_custom_call.1
$region0: #{tpu_custom_call.1}
  #allocation0 [shape = 'u32[]', space=smem, size = 0x4, offset = 0x4, fixed_abs, tag = 'smem constant byte address 0x4 - core index']
  #allocation1 [shape = 'u32[144,128]{1,0:T(1,128)}', space=vmem, size = 0x12000, scoped, tag = 'internal scratch']
  %s0 = inlined_call_operand.hbm [shape: bf16[128,256], index: 0, kind: input, shape index: {}]
  %s1 = inlined_call_operand.hbm [shape: bf16[256,256], index: 1, kind: input, shape index: {}]
  %s2 = inlined_call_operand.vmem [shape: f32[1,256], index: 2, kind: input, shape index: {}]
  %s3 = inlined_call_operand.hbm [shape: f32[128,256], index: 3, kind: output, shape index: {}]
  %s4 = sld [smem:[#allocation0]]
  $region61: #{tpu_custom_call.1} parent=0
    _
  %s6 = ssub.s32 1, %s4
  %s7 = scalar_select 0, %s6, %s4
  $region1: #{tpu_custom_call.1} parent=0
    #allocation2 [shape = 'u8[65536]{0}', space=vmem, size = 0x10000, scoped, tag = 'input window, operand 0, single buffered']
    #allocation3 [shape = 's32[2]{0}', space=sflag, size = 0x8, scoped, tag = 'scoped memory for tpu_custom_call.1']
    #allocation4 [shape = 's32[2]{0}', space=sflag, size = 0x8, scoped, tag = 'scoped memory for tpu_custom_call.1']
    #allocation5 [shape = 'u8[131072]{0}', space=vmem, size = 0x20000, scoped, tag = 'input window, operand 1']
    #allocation6 [shape = 's32[2]{0}', space=sflag, size = 0x8, scoped, tag = 'scoped memory for tpu_custom_call.1']
    #allocation7 [shape = 'u8[131072]{0}', space=vmem, size = 0x20000, scoped, tag = 'output window, operand 0']
    %8 = vsyncpa [#allocation3], 0
    %9 = vsyncpa [#allocation6], 0
    %s10 = scalar_lea.sflag [#allocation6], 1
    %11 = vsyncpa %s10, 0
    %12 = vsyncpa [#allocation4], 0
    %s13 = scalar_lea.sflag [#allocation4], 1
    %14 = vsyncpa %s13, 0
    loop: start=0, step=1, limit=4
    $region2: #{tpu_custom_call.1} parent=1 // loop_pre_header
      _
    $region3: #{tpu_custom_call.1} parent=1 // loop_header
      %s16 = sphi 0, %s20
      %p17 = scmp.ge.s32.totalorder %s16, 4
      %s23 = sphi 0, %s42
      %s24 = sphi 0, %s38
      %s25 = sphi 0, %s34
      %s26 = sphi 0, %s23
      %s27 = sphi 0, %s24
      %s28 = sphi 0, %s25
      %s29 = sphi 0, %s26
      %s30 = sphi 0, %s27
      %s31 = sphi 0, %s28
      %s47 = sphi 0, %s49
      %s50 = sphi 0, %s47
      %s51 = sphi 0, %s50
      %s67 = sphi 0, %s51
      %s75 = sphi 0, %s77
      %s78 = sphi 0, %s75
      %s79 = sphi 0, %s78
      %s95 = sphi 0, %s79
      %s101 = sphi 0, %s103
      %s104 = sphi 0, %s101
      %s105 = sphi 0, %s104
      %s121 = sphi 0, %s105
      %s129 = sphi 0, %s131
      %s132 = sphi 0, %s129
      %s133 = sphi 0, %s132
      %s149 = sphi 0, %s133
    $region4: #{tpu_custom_call.1} parent=1 // loop_header_branch
      %19 = sbr.rel (%p17) target = $region8
    $region5: #{tpu_custom_call.1} parent=1 // loop_body
      %s21 = ssub.s32 %s16, 1
      %s22 = ssub.s32 %s16, 2
      %s32 = sadd.s32 1, %s25
      %p33 = scmp.ge.s32.totalorder %s32, 1
      %s34 = scalar_select %p33, 0, %s32
      %s35 = sadd.s32 1, %s24
      %s36 = scalar_select %p33, %s35, %s24
      %p37 = scmp.ge.s32.totalorder %s36, 2
      %s38 = scalar_select %p37, 0, %s36
      %s39 = sadd.s32 1, %s23
      %s40 = scalar_select %p37, %s39, %s23
      %p41 = scmp.ge.s32.totalorder %s40, 1
      %s42 = scalar_select %p41, 0, %s40
      %s43 = ssub.s32 %s23, %s42
      %s44 = ssub.s32 %s25, %s34
      %s45 = sor.u32 %s43, %s44
      %p46 = scmp.eq.s32.totalorder %s45, 0
      %s48 = sadd.s32 %s47, 1
      %s49 = scalar_select %p46, %s47, %s48
      %p52 = pneg %p46
      %p53 = scmp.eq.s32.totalorder %s16, 1
      %p54 = por %p52, %p53
      %p55 = scmp.ne.s32.totalorder %s47, %s50
      %p56 = scmp.eq.s32.totalorder %s16, 0
      %p57 = por %p55, %p56
      %p58 = scmp.ne.s32.totalorder %s47, %s50
      %p59 = scmp.eq.s32.totalorder %s21, 1
      %p60 = por %p58, %p59
      %p61 = scmp.ne.s32.totalorder %s50, %s51
      %p62 = scmp.eq.s32.totalorder %s21, 0
      %p63 = por %p61, %p62
      %p64 = scmp.ne.s32.totalorder %s50, %s51
      %p65 = scmp.eq.s32.totalorder %s22, 1
      %p66 = por %p64, %p65
      %p68 = scmp.ne.s32.totalorder %s51, %s67
      %p69 = scmp.eq.s32.totalorder %s22, 0
      %p70 = por %p68, %p69
      %s71 = ssub.s32 %s25, %s34
      %s72 = ssub.s32 %s24, %s38
      %s73 = sor.u32 %s71, %s72
      %p74 = scmp.eq.s32.totalorder %s73, 0
      %s76 = sadd.s32 %s75, 1
      %s77 = scalar_select %p74, %s75, %s76
      %p80 = pneg %p74
      %p81 = scmp.eq.s32.totalorder %s16, 1
      %p82 = por %p80, %p81
      %p83 = scmp.ne.s32.totalorder %s75, %s78
      %p84 = scmp.eq.s32.totalorder %s16, 0
      %p85 = por %p83, %p84
      %p86 = scmp.ne.s32.totalorder %s75, %s78
      %p87 = scmp.eq.s32.totalorder %s21, 1
      %p88 = por %p86, %p87
      %p89 = scmp.ne.s32.totalorder %s78, %s79
      %p90 = scmp.eq.s32.totalorder %s21, 0
      %p91 = por %p89, %p90
      %p92 = scmp.ne.s32.totalorder %s78, %s79
      %p93 = scmp.eq.s32.totalorder %s22, 1
      %p94 = por %p92, %p93
      %p96 = scmp.ne.s32.totalorder %s79, %s95
      %p97 = scmp.eq.s32.totalorder %s22, 0
      %p98 = por %p96, %p97
      %s99 = ssub.s32 %s24, %s38
      %p100 = scmp.eq.s32.totalorder %s99, 0
      %s102 = sadd.s32 %s101, 1
      %s103 = scalar_select %p100, %s101, %s102
      %p106 = pneg %p100
      %p107 = scmp.eq.s32.totalorder %s16, 1
      %p108 = por %p106, %p107
      %p109 = scmp.ne.s32.totalorder %s101, %s104
      %p110 = scmp.eq.s32.totalorder %s16, 0
      %p111 = por %p109, %p110
      %p112 = scmp.ne.s32.totalorder %s101, %s104
      %p113 = scmp.eq.s32.totalorder %s21, 1
      %p114 = por %p112, %p113
      %p115 = scmp.ne.s32.totalorder %s104, %s105
      %p116 = scmp.eq.s32.totalorder %s21, 0
      %p117 = por %p115, %p116
      %p118 = scmp.ne.s32.totalorder %s104, %s105
      %p119 = scmp.eq.s32.totalorder %s22, 1
      %p120 = por %p118, %p119
      %p122 = scmp.ne.s32.totalorder %s105, %s121
      %p123 = scmp.eq.s32.totalorder %s22, 0
      %p124 = por %p122, %p123
      %s125 = ssub.s32 %s23, %s42
      %s126 = ssub.s32 %s24, %s38
      %s127 = sor.u32 %s125, %s126
      %p128 = scmp.eq.s32.totalorder %s127, 0
      %s130 = sadd.s32 %s129, 1
      %s131 = scalar_select %p128, %s129, %s130
      %p134 = pneg %p128
      %p135 = scmp.eq.s32.totalorder %s16, 1
      %p136 = por %p134, %p135
      %p137 = scmp.ne.s32.totalorder %s129, %s132
      %p138 = scmp.eq.s32.totalorder %s16, 0
      %p139 = por %p137, %p138
      %p140 = scmp.ne.s32.totalorder %s129, %s132
      %p141 = scmp.eq.s32.totalorder %s21, 1
      %p142 = por %p140, %p141
      %p143 = scmp.ne.s32.totalorder %s132, %s133
      %p144 = scmp.eq.s32.totalorder %s21, 0
      %p145 = por %p143, %p144
      %p146 = scmp.ne.s32.totalorder %s132, %s133
      %p147 = scmp.eq.s32.totalorder %s22, 1
      %p148 = por %p146, %p147
      %p150 = scmp.ne.s32.totalorder %s133, %s149
      %p151 = scmp.eq.s32.totalorder %s22, 0
      %p152 = por %p150, %p151
      %p153 = scmp.le.s32.totalorder 1, %s16
      %p154 = scmp.lt.s32.totalorder %s16, 3
      %p155 = pnand %p153, %p154
      %p156 = pneg %p155
      // Predicated region
      $region9: #{tpu_custom_call.1} parent=5 // pred_check
        _
      $region10: #{tpu_custom_call.1} parent=5 // pred_check_branch
        %158 = sbr.rel (%p155) target = $region12
      $region11: #{tpu_custom_call.1} parent=5 // pred_region
        %s159 = ssub.s32 %s16, 1
        // Predicated region
        $region13: #{tpu_custom_call.1} parent=11 // pred_check
          %p160 = pneg %p63
        $region14: #{tpu_custom_call.1} parent=11 // pred_check_branch
          %162 = sbr.rel (%p160) target = $region16
        $region15: #{tpu_custom_call.1} parent=11 // pred_region
          %s163 = smul.u32 16, %s26
          %s164 = smul.u32 2, %s28
          %s166 = ssub.s32 2048, 2048
          %167 = vsyncadd [#allocation3], %s166
          %s168 = smul.addr %s163, 2
          %s169 = sadd.s32 %s164, %s168
          %s170 = smul.addr %s169, 64
          %s171 = scalar_lea.hbm %s0, %s170
          %s172 = sshll.u32 [#allocation2], 4
          %s173 = int_to_ptr.vmem [resolvable:$true] %s172
          %178 = dma.hbm_to_vmem [thread:$0]  %s171, 2048, %s173, [#allocation3], 128, 128, 8
        $region16: #{tpu_custom_call.1} parent=11 // pred_fallthru
          _
      $region12: #{tpu_custom_call.1} parent=5 // pred_fallthru
        _
      %p179 = scmp.lt.s32.totalorder %s16, 2
      // Predicated region
      $region17: #{tpu_custom_call.1} parent=5 // pred_check
        %p180 = pneg %p179
      $region18: #{tpu_custom_call.1} parent=5 // pred_check_branch
        %182 = sbr.rel (%p180) target = $region20
      $region19: #{tpu_custom_call.1} parent=5 // pred_region
        // Predicated region
        $region21: #{tpu_custom_call.1} parent=19 // pred_check
          %p183 = pneg %p85
        $region22: #{tpu_custom_call.1} parent=19 // pred_check_branch
          %185 = sbr.rel (%p183) target = $region24
        $region23: #{tpu_custom_call.1} parent=19 // pred_region
          %s186 = sand.u32 %s75, 1
          %s187 = scalar_lea.sflag [#allocation6], %s186
          %s188 = sand.u32 %s75, 1
          %s189 = smul.addr %s188, 128
          %s190 = scalar_lea.vmem [#allocation5], %s189
          %s191 = smul.u32 32, %s25
          %s193 = ssub.s32 2048, 2048
          %194 = vsyncadd %s187, %s193
          %s195 = smul.addr %s191, 2
          %s196 = sadd.s32 %s24, %s195
          %s197 = smul.addr %s196, 64
          %s198 = scalar_lea.hbm %s1, %s197
          %s199 = sshll.u32 %s190, 4
          %s200 = int_to_ptr.vmem [resolvable:$true] %s199
          %205 = dma.hbm_to_vmem [thread:$0]  %s198, 2048, %s200, %s187, 128, 64, 4
        $region24: #{tpu_custom_call.1} parent=19 // pred_fallthru
          _
        // Predicated region
        $region25: #{tpu_custom_call.1} parent=19 // pred_check
          %p206 = pneg %p111
        $region26: #{tpu_custom_call.1} parent=19 // pred_check_branch
          %208 = sbr.rel (%p206) target = $region28
        $region27: #{tpu_custom_call.1} parent=19 // pred_region
          %p209 = scmp.lt.s32.totalorder %s24, 1
          %s210 = scalar_select %p209, %s24, 1
          %s211 = scalar_lea.vmem %s2, %s210
        $region28: #{tpu_custom_call.1} parent=19 // pred_fallthru
          _
      $region20: #{tpu_custom_call.1} parent=5 // pred_fallthru
        _
      %p212 = scmp.le.s32.totalorder 1, %s16
      %p213 = scmp.lt.s32.totalorder %s16, 3
      %p214 = pnand %p212, %p213
      %p215 = pneg %p214
      // Predicated region
      $region29: #{tpu_custom_call.1} parent=5 // pred_check
        _
      $region30: #{tpu_custom_call.1} parent=5 // pred_check_branch
        %217 = sbr.rel (%p214) target = $region32
      $region31: #{tpu_custom_call.1} parent=5 // pred_region
        %s218 = ssub.s32 %s16, 1
        // Predicated region
        $region33: #{tpu_custom_call.1} parent=31 // pred_check
          %p219 = pneg %p63
        $region34: #{tpu_custom_call.1} parent=31 // pred_check_branch
          %221 = sbr.rel (%p219) target = $region36
        $region35: #{tpu_custom_call.1} parent=31 // pred_region
          %222 = dma.done [#allocation3], 2048
        $region36: #{tpu_custom_call.1} parent=31 // pred_fallthru
          _
        %s223 = sand.u32 %s78, 1
        %s224 = scalar_lea.sflag [#allocation6], %s223
        %s225 = sand.u32 %s78, 1
        %s226 = smul.addr %s225, 128
        %s227 = scalar_lea.vmem [#allocation5], %s226
        // Predicated region
        $region37: #{tpu_custom_call.1} parent=31 // pred_check
          %p228 = pneg %p91
        $region38: #{tpu_custom_call.1} parent=31 // pred_check_branch
          %230 = sbr.rel (%p228) target = $region40
        $region39: #{tpu_custom_call.1} parent=31 // pred_region
          %231 = dma.done %s224, 2048
        $region40: #{tpu_custom_call.1} parent=31 // pred_fallthru
          _
        %p232 = pneg %p63
        %p233 = pneg %p60
        %s234 = sand.u32 %s78, 1
        %s235 = scalar_lea.sflag [#allocation6], %s234
        %s236 = sand.u32 %s78, 1
        %s237 = smul.addr %s236, 128
        %s238 = scalar_lea.vmem [#allocation5], %s237
        %p239 = pneg %p91
        %p240 = pneg %p88
        %p241 = scmp.lt.s32.totalorder %s27, 1
        %s242 = scalar_select %p241, %s27, 1
        %s243 = scalar_lea.vmem %s2, %s242
        %p244 = pneg %p117
        %p245 = pneg %p114
        %p246 = pneg %p145
        %p247 = pneg %p142
        %s248 = sand.u32 %s132, 1
        %s249 = scalar_lea.sflag [#allocation4], %s248
        %s250 = sand.u32 %s132, 1
        %s251 = smul.addr %s250, 128
        %s252 = scalar_lea.vmem [#allocation7], %s251
        %s253 = smul.u32 16, %s26
        %s254 = smul.u32 2, %s28
        %s255 = smul.u32 32, %s28
        %p256 = scmp.lt.s32.totalorder %s27, 1
        %s257 = scalar_select %p256, %s27, 1
        %s258 = scalar_lea.vmem %s2, %s257
        %s259 = smul.u32 16, %s26
        %p261 = scmp.eq.s32.totalorder %s28, 0
        // Predicated region
        $region41: #{tpu_custom_call.1} parent=31 // pred_check
          %p262 = pneg %p261
        $region42: #{tpu_custom_call.1} parent=31 // pred_check_branch
          %264 = sbr.rel (%p262) target = $region44
        $region43: #{tpu_custom_call.1} parent=31 // pred_region
          %265 = vst [vmem:[%s252] sm:$0xff] 0.0
          %266 = vst [vmem:[%s252 + $0x8] sm:$0xff] 0.0
          %267 = vst [vmem:[%s252 + $0x10] sm:$0xff] 0.0
          %268 = vst [vmem:[%s252 + $0x18] sm:$0xff] 0.0
          %269 = vst [vmem:[%s252 + $0x20] sm:$0xff] 0.0
          %270 = vst [vmem:[%s252 + $0x28] sm:$0xff] 0.0
          %271 = vst [vmem:[%s252 + $0x30] sm:$0xff] 0.0
          %272 = vst [vmem:[%s252 + $0x38] sm:$0xff] 0.0
          %273 = vst [vmem:[%s252 + $0x40] sm:$0xff] 0.0
          %274 = vst [vmem:[%s252 + $0x48] sm:$0xff] 0.0
          %275 = vst [vmem:[%s252 + $0x50] sm:$0xff] 0.0
          %276 = vst [vmem:[%s252 + $0x58] sm:$0xff] 0.0
          %277 = vst [vmem:[%s252 + $0x60] sm:$0xff] 0.0
          %278 = vst [vmem:[%s252 + $0x68] sm:$0xff] 0.0
          %279 = vst [vmem:[%s252 + $0x70] sm:$0xff] 0.0
          %280 = vst [vmem:[%s252 + $0x78] sm:$0xff] 0.0
        $region44: #{tpu_custom_call.1} parent=31 // pred_fallthru
          _
        %v281 = vld [vmem:[%s252] sm:$0xff]
        %v282 = vld [vmem:[%s252 + $0x8] sm:$0xff]
        %v283 = vld [vmem:[%s252 + $0x10] sm:$0xff]
        %v284 = vld [vmem:[%s252 + $0x18] sm:$0xff]
        %v285 = vld [vmem:[%s252 + $0x20] sm:$0xff]
        %v286 = vld [vmem:[%s252 + $0x28] sm:$0xff]
        %v287 = vld [vmem:[%s252 + $0x30] sm:$0xff]
        %v288 = vld [vmem:[%s252 + $0x38] sm:$0xff]
        %v289 = vld [vmem:[%s252 + $0x40] sm:$0xff]
        %v290 = vld [vmem:[%s252 + $0x48] sm:$0xff]
        %v291 = vld [vmem:[%s252 + $0x50] sm:$0xff]
        %v292 = vld [vmem:[%s252 + $0x58] sm:$0xff]
        %v293 = vld [vmem:[%s252 + $0x60] sm:$0xff]
        %v294 = vld [vmem:[%s252 + $0x68] sm:$0xff]
        %v295 = vld [vmem:[%s252 + $0x70] sm:$0xff]
        %v296 = vld [vmem:[%s252 + $0x78] sm:$0xff]
        %v297 = vld [vmem:[#allocation2] sm:$0xff]
        %v298 = vld [vmem:[#allocation2 + $0x8] sm:$0xff]
        %v299 = vld [vmem:[#allocation2 + $0x10] sm:$0xff]
        %v300 = vld [vmem:[#allocation2 + $0x18] sm:$0xff]
        %v301 = vld [vmem:[#allocation2 + $0x20] sm:$0xff]
        %v302 = vld [vmem:[#allocation2 + $0x28] sm:$0xff]
        %v303 = vld [vmem:[#allocation2 + $0x30] sm:$0xff]
        %v304 = vld [vmem:[#allocation2 + $0x38] sm:$0xff]
        %v305 = vld [vmem:[#allocation2 + $0x40] sm:$0xff]
        %v306 = vld [vmem:[#allocation2 + $0x48] sm:$0xff]
        %v307 = vld [vmem:[#allocation2 + $0x50] sm:$0xff]
        %v308 = vld [vmem:[#allocation2 + $0x58] sm:$0xff]
        %v309 = vld [vmem:[#allocation2 + $0x60] sm:$0xff]
        %v310 = vld [vmem:[#allocation2 + $0x68] sm:$0xff]
        %v311 = vld [vmem:[#allocation2 + $0x70] sm:$0xff]
        %v312 = vld [vmem:[#allocation2 + $0x78] sm:$0xff]
        %v313 = vld [vmem:[%s227] sm:$0xf]
        %v314 = vld [vmem:[%s227 + $0x4] sm:$0xf]
        %v315 = vld [vmem:[%s227 + $0x8] sm:$0xf]
        %v316 = vld [vmem:[%s227 + $0xc] sm:$0xf]
        %v317 = vld [vmem:[%s227 + $0x10] sm:$0xf]
        %v318 = vld [vmem:[%s227 + $0x14] sm:$0xf]
        %v319 = vld [vmem:[%s227 + $0x18] sm:$0xf]
        %v320 = vld [vmem:[%s227 + $0x1c] sm:$0xf]
        %v321 = vld [vmem:[%s227 + $0x20] sm:$0xf]
        %v322 = vld [vmem:[%s227 + $0x24] sm:$0xf]
        %v323 = vld [vmem:[%s227 + $0x28] sm:$0xf]
        %v324 = vld [vmem:[%s227 + $0x2c] sm:$0xf]
        %v325 = vld [vmem:[%s227 + $0x30] sm:$0xf]
        %v326 = vld [vmem:[%s227 + $0x34] sm:$0xf]
        %v327 = vld [vmem:[%s227 + $0x38] sm:$0xf]
        %v328 = vld [vmem:[%s227 + $0x3c] sm:$0xf]
        %v329 = vld [vmem:[%s227 + $0x40] sm:$0xf]
        %v330 = vld [vmem:[%s227 + $0x44] sm:$0xf]
        %v331 = vld [vmem:[%s227 + $0x48] sm:$0xf]
        %v332 = vld [vmem:[%s227 + $0x4c] sm:$0xf]
        %v333 = vld [vmem:[%s227 + $0x50] sm:$0xf]
        %v334 = vld [vmem:[%s227 + $0x54] sm:$0xf]
        %v335 = vld [vmem:[%s227 + $0x58] sm:$0xf]
        %v336 = vld [vmem:[%s227 + $0x5c] sm:$0xf]
        %v337 = vld [vmem:[%s227 + $0x60] sm:$0xf]
        %v338 = vld [vmem:[%s227 + $0x64] sm:$0xf]
        %v339 = vld [vmem:[%s227 + $0x68] sm:$0xf]
        %v340 = vld [vmem:[%s227 + $0x6c] sm:$0xf]
        %v341 = vld [vmem:[%s227 + $0x70] sm:$0xf]
        %v342 = vld [vmem:[%s227 + $0x74] sm:$0xf]
        %v343 = vld [vmem:[%s227 + $0x78] sm:$0xf]
        %v344 = vld [vmem:[%s227 + $0x7c] sm:$0xf]
        %v361 = vunpack.c.l.b16 %v297
        %v362 = vunpack.c.h.b16 %v297
        %v363 = vunpack.c.l.b16 %v298
        %v364 = vunpack.c.h.b16 %v298
        %v365 = vunpack.c.l.b16 %v299
        %v366 = vunpack.c.h.b16 %v299
        %v367 = vunpack.c.l.b16 %v300
        %v368 = vunpack.c.h.b16 %v300
        %v369 = vunpack.c.l.b16 %v301
        %v370 = vunpack.c.h.b16 %v301
        %v371 = vunpack.c.l.b16 %v302
        %v372 = vunpack.c.h.b16 %v302
        %v373 = vunpack.c.l.b16 %v303
        %v374 = vunpack.c.h.b16 %v303
        %v375 = vunpack.c.l.b16 %v304
        %v376 = vunpack.c.h.b16 %v304
        %v377 = vunpack.c.l.b16 %v305
        %v378 = vunpack.c.h.b16 %v305
        %v379 = vunpack.c.l.b16 %v306
        %v380 = vunpack.c.h.b16 %v306
        %v381 = vunpack.c.l.b16 %v307
        %v382 = vunpack.c.h.b16 %v307
        %v383 = vunpack.c.l.b16 %v308
        %v384 = vunpack.c.h.b16 %v308
        %v385 = vunpack.c.l.b16 %v309
        %v386 = vunpack.c.h.b16 %v309
        %v387 = vunpack.c.l.b16 %v310
        %v388 = vunpack.c.h.b16 %v310
        %v389 = vunpack.c.l.b16 %v311
        %v390 = vunpack.c.h.b16 %v311
        %v391 = vunpack.c.l.b16 %v312
        %v392 = vunpack.c.h.b16 %v312
        %v393 = vpack.c.b16 %v363, %v361
        %v394 = vpack.c.b16 %v364, %v362
        %v395 = vpack.c.b16 %v367, %v365
        %v396 = vpack.c.b16 %v368, %v366
        %v397 = vpack.c.b16 %v371, %v369
        %v398 = vpack.c.b16 %v372, %v370
        %v399 = vpack.c.b16 %v375, %v373
        %v400 = vpack.c.b16 %v376, %v374
        %v401 = vpack.c.b16 %v379, %v377
        %v402 = vpack.c.b16 %v380, %v378
        %v403 = vpack.c.b16 %v383, %v381
        %v404 = vpack.c.b16 %v384, %v382
        %v405 = vpack.c.b16 %v387, %v385
        %v406 = vpack.c.b16 %v388, %v386
        %v407 = vpack.c.b16 %v391, %v389
        %v408 = vpack.c.b16 %v392, %v390
        %v457 = vunpack.c.l.b16 %v313
        %v458 = vunpack.c.l.b16 %v314
        %v459 = vunpack.c.l.b16 %v315
        %v460 = vunpack.c.l.b16 %v316
        %v461 = vunpack.c.l.b16 %v317
        %v462 = vunpack.c.l.b16 %v318
        %v463 = vunpack.c.l.b16 %v319
        %v464 = vunpack.c.l.b16 %v320
        %v465 = vunpack.c.l.b16 %v321
        %v466 = vunpack.c.l.b16 %v322
        %v467 = vunpack.c.l.b16 %v323
        %v468 = vunpack.c.l.b16 %v324
        %v469 = vunpack.c.l.b16 %v325
        %v470 = vunpack.c.l.b16 %v326
        %v471 = vunpack.c.l.b16 %v327
        %v472 = vunpack.c.l.b16 %v328
        %v473 = vunpack.c.l.b16 %v329
        %v474 = vunpack.c.l.b16 %v330
        %v475 = vunpack.c.l.b16 %v331
        %v476 = vunpack.c.l.b16 %v332
        %v477 = vunpack.c.l.b16 %v333
        %v478 = vunpack.c.l.b16 %v334
        %v479 = vunpack.c.l.b16 %v335
        %v480 = vunpack.c.l.b16 %v336
        %v481 = vunpack.c.l.b16 %v337
        %v482 = vunpack.c.l.b16 %v338
        %v483 = vunpack.c.l.b16 %v339
        %v484 = vunpack.c.l.b16 %v340
        %v485 = vunpack.c.l.b16 %v341
        %v486 = vunpack.c.l.b16 %v342
        %v487 = vunpack.c.l.b16 %v343
        %v488 = vunpack.c.l.b16 %v344
        %v489 = vpack.c.b16 %v458, %v457
        %v490 = vpack.c.b16 %v460, %v459
        %v491 = vpack.c.b16 %v462, %v461
        %v492 = vpack.c.b16 %v464, %v463
        %v493 = vpack.c.b16 %v466, %v465
        %v494 = vpack.c.b16 %v468, %v467
        %v495 = vpack.c.b16 %v470, %v469
        %v496 = vpack.c.b16 %v472, %v471
        %v497 = vpack.c.b16 %v474, %v473
        %v498 = vpack.c.b16 %v476, %v475
        %v499 = vpack.c.b16 %v478, %v477
        %v500 = vpack.c.b16 %v480, %v479
        %v501 = vpack.c.b16 %v482, %v481
        %v502 = vpack.c.b16 %v484, %v483
        %v503 = vpack.c.b16 %v486, %v485
        %v504 = vpack.c.b16 %v488, %v487
        %521 = vmatprep.subr.bf16.mxu0 0
        %522 = vmatpush1.bf16.msra.mxu0 %v496
        %523 = vmatprep.subr.bf16.mxu0 0
        %524 = vmatpush1.bf16.msra.mxu0 %v495
        %525 = vmatprep.subr.bf16.mxu0 0
        %526 = vmatpush1.bf16.msra.mxu0 %v494
        %527 = vmatprep.subr.bf16.mxu0 0
        %528 = vmatpush1.bf16.msra.mxu0 %v493
        %529 = vmatprep.subr.bf16.mxu0 0
        %530 = vmatpush1.bf16.msra.mxu0 %v492
        %531 = vmatprep.subr.bf16.mxu0 0
        %532 = vmatpush1.bf16.msra.mxu0 %v491
        %533 = vmatprep.subr.bf16.mxu0 0
        %534 = vmatpush1.bf16.msra.mxu0 %v490
        %535 = vmatprep.subr.bf16.mxu0 0
        %536 = vmatpush1.bf16.msra.mxu0 %v489
        %537 = vmatprep.subr.bf16.mxu0 0
        %538 = vmatpush2.bf16.msra.mxu0 %v504
        %539 = vmatprep.subr.bf16.mxu0 0
        %540 = vmatpush2.bf16.msra.mxu0 %v503
        %541 = vmatprep.subr.bf16.mxu0 0
        %542 = vmatpush2.bf16.msra.mxu0 %v502
        %543 = vmatprep.subr.bf16.mxu0 0
        %544 = vmatpush2.bf16.msra.mxu0 %v501
        %545 = vmatprep.subr.bf16.mxu0 0
        %546 = vmatpush2.bf16.msra.mxu0 %v500
        %547 = vmatprep.subr.bf16.mxu0 0
        %548 = vmatpush2.bf16.msra.mxu0 %v499
        %549 = vmatprep.subr.bf16.mxu0 0
        %550 = vmatpush2.bf16.msra.mxu0 %v498
        %551 = vmatprep.subr.bf16.mxu0 0
        %552 = vmatpush2.bf16.msra.mxu0 %v497
        %553 = vmatprep.mubr.bf16.mxu0 %v394
        %554 = vmatmul.mubr.bf16.gmra.mxu0 %v393
        %v555 = vpop.f32.mrf.mxu0
        %v556 = vadd.f32 0.0, %v555
        %v557 = vpop.f32.mrf.mxu0
        %v558 = vpop.f32.mrf.mxu0
        %v559 = vadd.f32 0.0, %v558
        %v560 = vpop.f32.mrf.mxu0
        %561 = vmatprep.mubr.bf16.mxu0 %v396
        %562 = vmatmul.mubr.bf16.gmra.mxu0 %v395
        %v563 = vpop.f32.mrf.mxu0
        %v564 = vadd.f32 0.0, %v563
        %v565 = vpop.f32.mrf.mxu0
        %v566 = vpop.f32.mrf.mxu0
        %v567 = vadd.f32 0.0, %v566
        %v568 = vpop.f32.mrf.mxu0
        %569 = vmatprep.mubr.bf16.mxu0 %v398
        %570 = vmatmul.mubr.bf16.gmra.mxu0 %v397
        %v571 = vpop.f32.mrf.mxu0
        %v572 = vadd.f32 0.0, %v571
        %v573 = vpop.f32.mrf.mxu0
        %v574 = vpop.f32.mrf.mxu0
        %v575 = vadd.f32 0.0, %v574
        %v576 = vpop.f32.mrf.mxu0
        %577 = vmatprep.mubr.bf16.mxu0 %v400
        %578 = vmatmul.mubr.bf16.gmra.mxu0 %v399
        %v579 = vpop.f32.mrf.mxu0
        %v580 = vadd.f32 0.0, %v579
        %v581 = vpop.f32.mrf.mxu0
        %v582 = vpop.f32.mrf.mxu0
        %v583 = vadd.f32 0.0, %v582
        %v584 = vpop.f32.mrf.mxu0
        %585 = vmatprep.mubr.bf16.mxu0 %v402
        %586 = vmatmul.mubr.bf16.gmra.mxu0 %v401
        %v587 = vpop.f32.mrf.mxu0
        %v588 = vadd.f32 0.0, %v587
        %v589 = vpop.f32.mrf.mxu0
        %v590 = vpop.f32.mrf.mxu0
        %v591 = vadd.f32 0.0, %v590
        %v592 = vpop.f32.mrf.mxu0
        %593 = vmatprep.mubr.bf16.mxu0 %v404
        %594 = vmatmul.mubr.bf16.gmra.mxu0 %v403
        %v595 = vpop.f32.mrf.mxu0
        %v596 = vadd.f32 0.0, %v595
        %v597 = vpop.f32.mrf.mxu0
        %v598 = vpop.f32.mrf.mxu0
        %v599 = vadd.f32 0.0, %v598
        %v600 = vpop.f32.mrf.mxu0
        %601 = vmatprep.mubr.bf16.mxu0 %v406
        %602 = vmatmul.mubr.bf16.gmra.mxu0 %v405
        %v603 = vpop.f32.mrf.mxu0
        %v604 = vadd.f32 0.0, %v603
        %v605 = vpop.f32.mrf.mxu0
        %v606 = vpop.f32.mrf.mxu0
        %v607 = vadd.f32 0.0, %v606
        %v608 = vpop.f32.mrf.mxu0
        %609 = vmatprep.mubr.bf16.mxu0 %v408
        %610 = vmatmul.mubr.bf16.gmra.mxu0 %v407
        %v611 = vpop.f32.mrf.mxu0
        %v612 = vadd.f32 0.0, %v611
        %v613 = vpop.f32.mrf.mxu0
        %v614 = vpop.f32.mrf.mxu0
        %v615 = vadd.f32 0.0, %v614
        %v616 = vpop.f32.mrf.mxu0
        %617 = vdwg.mxu0
        %v618 = vadd.f32 %v281, %v556
        %v619 = vadd.f32 %v282, %v559
        %v620 = vadd.f32 %v283, %v564
        %v621 = vadd.f32 %v284, %v567
        %v622 = vadd.f32 %v285, %v572
        %v623 = vadd.f32 %v286, %v575
        %v624 = vadd.f32 %v287, %v580
        %v625 = vadd.f32 %v288, %v583
        %v626 = vadd.f32 %v289, %v588
        %v627 = vadd.f32 %v290, %v591
        %v628 = vadd.f32 %v291, %v596
        %v629 = vadd.f32 %v292, %v599
        %v630 = vadd.f32 %v293, %v604
        %v631 = vadd.f32 %v294, %v607
        %v632 = vadd.f32 %v295, %v612
        %v633 = vadd.f32 %v296, %v615
        %634 = vst [vmem:[%s252] sm:$0xff] %v618
        %635 = vst [vmem:[%s252 + $0x8] sm:$0xff] %v619
        %636 = vst [vmem:[%s252 + $0x10] sm:$0xff] %v620
        %637 = vst [vmem:[%s252 + $0x18] sm:$0xff] %v621
        %638 = vst [vmem:[%s252 + $0x20] sm:$0xff] %v622
        %639 = vst [vmem:[%s252 + $0x28] sm:$0xff] %v623
        %640 = vst [vmem:[%s252 + $0x30] sm:$0xff] %v624
        %641 = vst [vmem:[%s252 + $0x38] sm:$0xff] %v625
        %642 = vst [vmem:[%s252 + $0x40] sm:$0xff] %v626
        %643 = vst [vmem:[%s252 + $0x48] sm:$0xff] %v627
        %644 = vst [vmem:[%s252 + $0x50] sm:$0xff] %v628
        %645 = vst [vmem:[%s252 + $0x58] sm:$0xff] %v629
        %646 = vst [vmem:[%s252 + $0x60] sm:$0xff] %v630
        %647 = vst [vmem:[%s252 + $0x68] sm:$0xff] %v631
        %648 = vst [vmem:[%s252 + $0x70] sm:$0xff] %v632
        %649 = vst [vmem:[%s252 + $0x78] sm:$0xff] %v633
        // Predicated region
        $region45: #{tpu_custom_call.1} parent=31 // pred_check
          %p650 = pneg %p261
        $region46: #{tpu_custom_call.1} parent=31 // pred_check_branch
          %652 = sbr.rel (%p650) target = $region48
        $region47: #{tpu_custom_call.1} parent=31 // pred_region
          %v653 = vld [vmem:[%s252] sm:$0xff]
          %v654 = vld [vmem:[%s252 + $0x8] sm:$0xff]
          %v655 = vld [vmem:[%s252 + $0x10] sm:$0xff]
          %v656 = vld [vmem:[%s252 + $0x18] sm:$0xff]
          %v657 = vld [vmem:[%s252 + $0x20] sm:$0xff]
          %v658 = vld [vmem:[%s252 + $0x28] sm:$0xff]
          %v659 = vld [vmem:[%s252 + $0x30] sm:$0xff]
          %v660 = vld [vmem:[%s252 + $0x38] sm:$0xff]
          %v661 = vld [vmem:[%s252 + $0x40] sm:$0xff]
          %v662 = vld [vmem:[%s252 + $0x48] sm:$0xff]
          %v663 = vld [vmem:[%s252 + $0x50] sm:$0xff]
          %v664 = vld [vmem:[%s252 + $0x58] sm:$0xff]
          %v665 = vld [vmem:[%s252 + $0x60] sm:$0xff]
          %v666 = vld [vmem:[%s252 + $0x68] sm:$0xff]
          %v667 = vld [vmem:[%s252 + $0x70] sm:$0xff]
          %v668 = vld [vmem:[%s252 + $0x78] sm:$0xff]
          %v669 = vld [vmem:[%s258] sm:$0x1]
          %v671 = vlaneseq
          %v672 = vshrl.u32 %v671, 7
          %v673 = vsub.s32 0, %v672
          %v674 = vrot.slane %v669, %v673
          %v676 = vadd.f32 %v653, %v674
          %v677 = vadd.f32 %v654, %v674
          %v678 = vadd.f32 %v655, %v674
          %v679 = vadd.f32 %v656, %v674
          %v680 = vadd.f32 %v657, %v674
          %v681 = vadd.f32 %v658, %v674
          %v682 = vadd.f32 %v659, %v674
          %v683 = vadd.f32 %v660, %v674
          %v684 = vadd.f32 %v661, %v674
          %v685 = vadd.f32 %v662, %v674
          %v686 = vadd.f32 %v663, %v674
          %v687 = vadd.f32 %v664, %v674
          %v688 = vadd.f32 %v665, %v674
          %v689 = vadd.f32 %v666, %v674
          %v690 = vadd.f32 %v667, %v674
          %v691 = vadd.f32 %v668, %v674
          %692 = vst [vmem:[%s252] sm:$0xff] %v676
          %693 = vst [vmem:[%s252 + $0x8] sm:$0xff] %v677
          %694 = vst [vmem:[%s252 + $0x10] sm:$0xff] %v678
          %695 = vst [vmem:[%s252 + $0x18] sm:$0xff] %v679
          %696 = vst [vmem:[%s252 + $0x20] sm:$0xff] %v680
          %697 = vst [vmem:[%s252 + $0x28] sm:$0xff] %v681
          %698 = vst [vmem:[%s252 + $0x30] sm:$0xff] %v682
          %699 = vst [vmem:[%s252 + $0x38] sm:$0xff] %v683
          %700 = vst [vmem:[%s252 + $0x40] sm:$0xff] %v684
          %701 = vst [vmem:[%s252 + $0x48] sm:$0xff] %v685
          %702 = vst [vmem:[%s252 + $0x50] sm:$0xff] %v686
          %703 = vst [vmem:[%s252 + $0x58] sm:$0xff] %v687
          %704 = vst [vmem:[%s252 + $0x60] sm:$0xff] %v688
          %705 = vst [vmem:[%s252 + $0x68] sm:$0xff] %v689
          %706 = vst [vmem:[%s252 + $0x70] sm:$0xff] %v690
          %707 = vst [vmem:[%s252 + $0x78] sm:$0xff] %v691
        $region48: #{tpu_custom_call.1} parent=31 // pred_fallthru
          _
        %s708 = sand.u32 %s132, 1
        %s709 = scalar_lea.sflag [#allocation4], %s708
        %s710 = sand.u32 %s132, 1
        %s711 = smul.addr %s710, 128
        %s712 = scalar_lea.vmem [#allocation7], %s711
        // Predicated region
        $region49: #{tpu_custom_call.1} parent=31 // pred_check
          %p713 = pneg %p142
        $region50: #{tpu_custom_call.1} parent=31 // pred_check_branch
          %715 = sbr.rel (%p713) target = $region52
        $region51: #{tpu_custom_call.1} parent=31 // pred_region
          %s716 = smul.u32 16, %s26
          %s718 = ssub.s32 2048, 2048
          %719 = vsyncadd %s709, %s718
          %s720 = smul.addr %s716, 2
          %s721 = sadd.s32 %s27, %s720
          %s722 = smul.addr %s721, 128
          %s723 = scalar_lea.hbm %s3, %s722
          %s724 = sshll.u32 %s712, 4
          %s725 = int_to_ptr.vmem [resolvable:$true] %s724
          %730 = dma.vmem_to_hbm [thread:$0]  %s725, 2048, %s723, %s709, 128, 256, 8
        $region52: #{tpu_custom_call.1} parent=31 // pred_fallthru
          _
      $region32: #{tpu_custom_call.1} parent=5 // pred_fallthru
        _
      %p731 = scmp.le.s32.totalorder 2, %s16
      // Predicated region
      $region53: #{tpu_custom_call.1} parent=5 // pred_check
        %p732 = pneg %p731
      $region54: #{tpu_custom_call.1} parent=5 // pred_check_branch
        %734 = sbr.rel (%p732) target = $region56
      $region55: #{tpu_custom_call.1} parent=5 // pred_region
        %s735 = ssub.s32 %s16, 2
        // Predicated region
        $region57: #{tpu_custom_call.1} parent=55 // pred_check
          %p736 = pneg %p148
        $region58: #{tpu_custom_call.1} parent=55 // pred_check_branch
          %738 = sbr.rel (%p736) target = $region60
        $region59: #{tpu_custom_call.1} parent=55 // pred_region
          %s739 = sand.u32 %s133, 1
          %s740 = scalar_lea.sflag [#allocation4], %s739
          %s741 = sand.u32 %s133, 1
          %s742 = smul.addr %s741, 128
          %s743 = scalar_lea.vmem [#allocation7], %s742
          %744 = dma.done %s740, 2048
        $region60: #{tpu_custom_call.1} parent=55 // pred_fallthru
          _
      $region56: #{tpu_custom_call.1} parent=5 // pred_fallthru
        _
    $region6: #{tpu_custom_call.1} parent=1 // loop_footer
      %s20 = sadd.s32 1, %s16
    $region7: #{tpu_custom_call.1} parent=1 // loop_footer_branch
      %15 = sbr.rel target = $region3
    $region8: #{tpu_custom_call.1} parent=1 // loop_exit
      _
    %745 = vsyncpa [#allocation3], 1
    %s746 = scalar_lea.sflag [#allocation3], 1
    %747 = vsyncpa %s746, 1
    %748 = vsyncpa [#allocation6], 1
    %s749 = scalar_lea.sflag [#allocation6], 1
    %750 = vsyncpa %s749, 1
    %751 = vsyncpa [#allocation4], 1
    %s752 = scalar_lea.sflag [#allocation4], 1
    %753 = vsyncpa %s752, 1

</llo_original>
